<compile_context>
chip_gen: v6e
topology: v6e:2x2x1
jax: 0.10.0
libtpu: 0.0.40
codegen_flags: <defaults>
</compile_context>

<pallas_src>
import functools
import math

import jax
import jax.numpy as jnp
from jax.experimental import pallas as pl
from jax.experimental.pallas import tpu as pltpu

_LANES = 128
_PAD_X = -1.0e4  # masked-out logit: sigmoid=0, softplus=0, max(x,0)=0, x*0=0 exactly


def _bce_dice_kernel(x_ref, t_ref, o_ref,
                     acc_bce, acc_int, acc_sin, acc_stg,
                     *, d_valid, k_per):
    j = pl.program_id(1)   # reduction-axis split (v7x dual-TC balance)
    k = pl.program_id(2)   # reduction step within the split

    @pl.when(k == 0)
    def _():
        acc_bce[...] = jnp.zeros_like(acc_bce)
        acc_int[...] = jnp.zeros_like(acc_int)
        acc_sin[...] = jnp.zeros_like(acc_sin)
        acc_stg[...] = jnp.zeros_like(acc_stg)

    x = x_ref[0].astype(jnp.float32)   # (tile_r, 128) logits (bf16/f32 in HBM)
    t = t_ref[0].astype(jnp.float32)   # (tile_r, 128) targets (bf16/int8/f32 in HBM)
    tile_r = x.shape[0]

    # Rows this grid step is responsible for: [row0, row0 + tile_r).
    row0 = (j * k_per + k) * tile_r
    needs_mask = (row0 + tile_r) * _LANES > d_valid

    def accumulate(xv, tv):
        # Shared transcendental: e = exp(-|x|) feeds both softplus and sigmoid.
        e = jnp.exp(-jnp.abs(xv))
        softplus = jnp.log1p(e)
        # Stable BCE-with-logits: max(x,0) - x*t + log1p(exp(-|x|))
        bce_elem = jnp.maximum(xv, 0.0) - xv * tv + softplus
        # sigmoid(x) from the same e; approx vrcp keeps the EUP off the critical path.
        inv = pl.reciprocal(1.0 + e, approx=True)
        sig = jnp.where(xv >= 0.0, inv, e * inv)

        def rsum(v):  # (tile_r, 128) -> (8, 128): pure vreg adds, no cross-lane work
            return jnp.sum(v.reshape(tile_r // 8, 8, _LANES), axis=0)

        acc_bce[...] += rsum(bce_elem)
        acc_int[...] += rsum(sig * tv)
        acc_sin[...] += rsum(sig)
        acc_stg[...] += rsum(tv)

    @pl.when(jnp.logical_not(needs_mask))
    def _():
        accumulate(x, t)

    @pl.when(needs_mask)
    def _():
        # Ragged tail (or fully-redundant split tile): mask by flat element index.
        rows = jax.lax.broadcasted_iota(jnp.int32, (tile_r, _LANES), 0)
        lanes = jax.lax.broadcasted_iota(jnp.int32, (tile_r, _LANES), 1)
        g = (row0 + rows) * _LANES + lanes
        m = g < d_valid
        accumulate(jnp.where(m, x, _PAD_X), jnp.where(m, t, 0.0))

    @pl.when(k == pl.num_programs(2) - 1)
    def _():
        o_ref[0, 0, 0] = acc_bce[...]
        o_ref[0, 0, 1] = acc_int[...]
        o_ref[0, 0, 2] = acc_sin[...]
        o_ref[0, 0, 3] = acc_stg[...]


def bce_dice_loss(inp, target, *, tile_rows=8192):
    """inp, target: (N, C, H, W) (or any (N, ...)) -> scalar float32 loss.

    Inputs are streamed at their stored dtype (f32 / bf16 logits, f32 / bf16 / int
    targets); all math is done in f32 inside the kernel.
    """
    n = inp.shape[0]
    d = math.prod(inp.shape[1:]) if len(inp.shape) > 1 else 1
    x2 = inp.reshape(n, d)
    t2 = target.reshape(n, d)

    # Lane-dense (N, R, 128) view. Zero-copy when D is a multiple of 128 with at
    # least 8 rows; otherwise pad minimally to the next full 128-lane row (the
    # padded values are masked in-kernel, so their value is irrelevant).
    if d % _LANES == 0 and d // _LANES >= 8:
        r_arr = d // _LANES
    else:
        r_arr = pl.cdiv(max(8, pl.cdiv(d, _LANES)), 8) * 8
        d_pad = r_arr * _LANES
        x2 = jnp.pad(x2, ((0, 0), (0, d_pad - d)))
        t2 = jnp.pad(t2, ((0, 0), (0, d_pad - d)))
    x3 = x2.reshape(n, r_arr, _LANES)
    t3 = t2.reshape(n, r_arr, _LANES)

    # Row-tile size: multiple of 8, never larger than the array's row extent.
    tile_r = max(8, (min(tile_rows, r_arr) // 8) * 8)
    k_total = pl.cdiv(r_arr, tile_r)

    # v7x dual-TensorCore balance: when N is odd (esp. N == 1) split the reduction
    # axis so the parallel work count is even.  Skip the split when it would add a
    # redundant (fully masked) tile worth a non-trivial fraction of HBM traffic.
    n_split = 2 if (n % 2 == 1 and k_total >= 2
                    and (k_total % 2 == 0 or k_total >= 8)) else 1
    k_per = pl.cdiv(k_total, n_split)

    def in_map(i, j, k):
        # Clamp so a (possibly) redundant final split-tile re-reads a valid block;
        # the in-kernel mask zeroes its contribution.
        return (i, jnp.minimum(j * k_per + k, k_total - 1), 0)

    kernel = functools.partial(_bce_dice_kernel, d_valid=d, k_per=k_per)

    partial = pl.pallas_call(
        kernel,
        out_shape=jax.ShapeDtypeStruct((n, n_split, 4, 8, _LANES), jnp.float32),
        grid=(n, n_split, k_per),
        in_specs=[
            pl.BlockSpec((1, tile_r, _LANES), in_map),
            pl.BlockSpec((1, tile_r, _LANES), in_map),
        ],
        out_specs=pl.BlockSpec((1, 1, 4, 8, _LANES),
                               lambda i, j, k: (i, j, 0, 0, 0)),
        scratch_shapes=[
            pltpu.VMEM((8, _LANES), jnp.float32),
            pltpu.VMEM((8, _LANES), jnp.float32),
            pltpu.VMEM((8, _LANES), jnp.float32),
            pltpu.VMEM((8, _LANES), jnp.float32),
        ],
        compiler_params=pltpu.CompilerParams(
            dimension_semantics=("parallel", "parallel", "arbitrary"),
            vmem_limit_bytes=48 * 1024 * 1024,
        ),
    )(x3, t3)

    # Tiny final combine in the wrapper (divides off the kernel critical path).
    sums = jnp.sum(partial, axis=(1, 3, 4))            # (N, 4)
    bce_sum = jnp.sum(sums[:, 0])
    inter = sums[:, 1]
    s_in = sums[:, 2]
    s_tg = sums[:, 3]

    smooth = 1e-05
    bce = bce_sum / jnp.float32(n * d)
    dice = (2.0 * inter + smooth) / (s_in + s_tg + smooth)
    dice_loss = 1.0 - jnp.sum(dice) / n
    return 0.5 * bce + dice_loss


def _reference(inp, target):
    # Pure-JAX reference reproducing the PyTorch forward.
    x = inp.astype(jnp.float32)
    t = target.astype(jnp.float32)
    bce = jnp.mean(jnp.maximum(x, 0.0) - x * t + jnp.log1p(jnp.exp(-jnp.abs(x))))
    smooth = 1e-05
    n = x.shape[0]
    xs = jax.nn.sigmoid(x).reshape(n, -1)
    ts = t.reshape(n, -1)
    inter = jnp.sum(xs * ts, axis=1)
    dice = (2.0 * inter + smooth) / (jnp.sum(xs, axis=1) + jnp.sum(ts, axis=1) + smooth)
    dice = 1.0 - jnp.sum(dice) / n
    return 0.5 * bce + dice


if __name__ == "__main__":
    key = jax.random.PRNGKey(0)
    k1, k2, k3, k4, k5, k6 = jax.random.split(key, 6)
    # Tolerance is set for the approximate EUP reciprocal used in the sigmoid
    # (relative error ~1e-4); everything else matches the f32 reference closely.
    TOL = 2e-3

    def check(loss, ref):
        loss = jax.block_until_ready(loss)
        ref = jax.block_until_ready(ref)
        assert jnp.allclose(loss, ref, rtol=TOL, atol=TOL), (loss, ref)

    # 1) Aligned NCHW shape (D % 1024 == 0): zero-copy fast path, no masking.
    x = jax.random.normal(k1, (2, 4, 16, 16), dtype=jnp.float32)    # logits
    y = jax.random.uniform(k2, (2, 4, 16, 16), dtype=jnp.float32)   # targets in [0,1]
    check(bce_dice_loss(x, y), _reference(x, y))

    # 2) bf16 inputs streamed at half the HBM bytes (upcast happens in-kernel).
    xb = x.astype(jnp.bfloat16)
    yb = y.astype(jnp.bfloat16)
    check(bce_dice_loss(xb, yb), _reference(xb, yb))

    # 3) Ragged D (not a multiple of 128): minimal pad + in-kernel tail masking.
    x2 = jax.random.normal(k3, (2, 3, 10, 10), dtype=jnp.float32)
    y2 = jax.random.uniform(k4, (2, 3, 10, 10), dtype=jnp.float32)
    check(bce_dice_loss(x2, y2), _reference(x2, y2))

    # 4) Odd N + small tiles: exercises the reduction-axis split (grid=(N,2,k))
    #    together with a partial last block and ragged lanes.
    x3_ = jax.random.normal(k5, (3, 5, 17, 19), dtype=jnp.float32)
    y3_ = jax.random.uniform(k6, (3, 5, 17, 19), dtype=jnp.float32)
    check(bce_dice_loss(x3_, y3_, tile_rows=8), _reference(x3_, y3_))

    # 5) N == 1, zero-copy path with the split active (k_total even).
    x4 = jax.random.normal(k1, (1, 8, 32, 32), dtype=jnp.float32)
    y4 = jax.random.uniform(k2, (1, 8, 32, 32), dtype=jnp.float32)
    check(bce_dice_loss(x4, y4, tile_rows=8), _reference(x4, y4))

    print("KERNEL_OK")
</pallas_src>

<mosaic_0001>
module attributes {stable_mosaic.version = 11 : i64} {
  func.func @_bce_dice_kernel(%arg0: i32, %arg1: i32, %arg2: i32, %arg3: memref<1x8x128xf32, #tpu.memory_space<vmem>>, %arg4: memref<1x8x128xf32, #tpu.memory_space<vmem>>, %arg5: memref<1x1x4x8x128xf32, #tpu.memory_space<vmem>>, %arg6: memref<8x128xf32, #tpu.memory_space<vmem>>, %arg7: memref<8x128xf32, #tpu.memory_space<vmem>>, %arg8: memref<8x128xf32, #tpu.memory_space<vmem>>, %arg9: memref<8x128xf32, #tpu.memory_space<vmem>>) attributes {dimension_semantics = [#tpu.dimension_semantics<parallel>, #tpu.dimension_semantics<parallel>, #tpu.dimension_semantics<arbitrary>], iteration_bounds = array<i64: 2, 1, 1>, scalar_prefetch = 0 : i64, scratch_operands = 4 : i64, tpu.core_type = #tpu.core_type<tc>, window_params = [{transform_indices = @transform_0, window_bounds = array<i64: 1, 8, 128>}, {transform_indices = @transform_1, window_bounds = array<i64: 1, 8, 128>}, {transform_indices = @transform_2, window_bounds = array<i64: 1, 1, 4, 8, 128>}]} {
    %c0_i32 = arith.constant 0 : i32
    %0 = arith.cmpi eq, %arg2, %c0_i32 : i32
    %1 = arith.extui %0 : i1 to i32
    %c0_i32_0 = arith.constant 0 : i32
    %2 = arith.cmpi ne, %1, %c0_i32_0 : i32
    scf.if %2 {
      %cst = arith.constant 0.000000e+00 : f32
      %21 = vector.broadcast %cst : f32 to vector<8x128xf32>
      %c0_11 = arith.constant 0 : index
      %c0_12 = arith.constant 0 : index
      %22 = vector.load %arg6[%c0_11, %c0_12] : memref<8x128xf32, #tpu.memory_space<vmem>>, vector<8x128xf32>
      tpu.vector_store %arg6[%c0_11, %c0_12], %21 {strides = array<i32>} : memref<8x128xf32, #tpu.memory_space<vmem>>, vector<8x128xf32>,
      %cst_13 = arith.constant 0.000000e+00 : f32
      %23 = vector.broadcast %cst_13 : f32 to vector<8x128xf32>
      %c0_14 = arith.constant 0 : index
      %c0_15 = arith.constant 0 : index
      %24 = vector.load %arg7[%c0_14, %c0_15] : memref<8x128xf32, #tpu.memory_space<vmem>>, vector<8x128xf32>
      tpu.vector_store %arg7[%c0_14, %c0_15], %23 {strides = array<i32>} : memref<8x128xf32, #tpu.memory_space<vmem>>, vector<8x128xf32>,
      %cst_16 = arith.constant 0.000000e+00 : f32
      %25 = vector.broadcast %cst_16 : f32 to vector<8x128xf32>
      %c0_17 = arith.constant 0 : index
      %c0_18 = arith.constant 0 : index
      %26 = vector.load %arg8[%c0_17, %c0_18] : memref<8x128xf32, #tpu.memory_space<vmem>>, vector<8x128xf32>
      tpu.vector_store %arg8[%c0_17, %c0_18], %25 {strides = array<i32>} : memref<8x128xf32, #tpu.memory_space<vmem>>, vector<8x128xf32>,
      %cst_19 = arith.constant 0.000000e+00 : f32
      %27 = vector.broadcast %cst_19 : f32 to vector<8x128xf32>
      %c0_20 = arith.constant 0 : index
      %c0_21 = arith.constant 0 : index
      %28 = vector.load %arg9[%c0_20, %c0_21] : memref<8x128xf32, #tpu.memory_space<vmem>>, vector<8x128xf32>
      tpu.vector_store %arg9[%c0_20, %c0_21], %27 {strides = array<i32>} : memref<8x128xf32, #tpu.memory_space<vmem>>, vector<8x128xf32>,
    } else {
    }
    %c0 = arith.constant 0 : index
    %c0_1 = arith.constant 0 : index
    %c0_2 = arith.constant 0 : index
    %3 = vector.load %arg3[%c0, %c0_1, %c0_2] : memref<1x8x128xf32, #tpu.memory_space<vmem>>, vector<1x8x128xf32>
    %4 = vector.shape_cast %3 : vector<1x8x128xf32> to vector<8x128xf32>
    %c0_3 = arith.constant 0 : index
    %c0_4 = arith.constant 0 : index
    %c0_5 = arith.constant 0 : index
    %5 = vector.load %arg4[%c0_3, %c0_4, %c0_5] : memref<1x8x128xf32, #tpu.memory_space<vmem>>, vector<1x8x128xf32>
    %6 = vector.shape_cast %5 : vector<1x8x128xf32> to vector<8x128xf32>
    %c1_i32 = arith.constant 1 : i32
    %7 = arith.muli %arg1, %c1_i32 : i32
    %8 = arith.addi %7, %arg2 : i32
    %c8_i32 = arith.constant 8 : i32
    %9 = arith.muli %8, %c8_i32 : i32
    %c8_i32_6 = arith.constant 8 : i32
    %10 = arith.addi %9, %c8_i32_6 : i32
    %c128_i32 = arith.constant 128 : i32
    %11 = arith.muli %10, %c128_i32 : i32
    %c1024_i32 = arith.constant 1024 : i32
    %12 = arith.cmpi sgt, %11, %c1024_i32 : i32
    %true = arith.constant true
    %13 = arith.xori %12, %true : i1
    %14 = arith.extui %13 : i1 to i32
    %c0_i32_7 = arith.constant 0 : i32
    %15 = arith.cmpi ne, %14, %c0_i32_7 : i32
    scf.if %15 {
      %21 = math.absf %4 : vector<8x128xf32>
      %cst = arith.constant 0.000000e+00 : f32
      %22 = vector.broadcast %cst : f32 to vector<8x128xf32>
      %23 = arith.subf %22, %21 : vector<8x128xf32>
      %24 = math.exp %23 : vector<8x128xf32>
      %25 = math.log1p %24 : vector<8x128xf32>
      %cst_11 = arith.constant 0.000000e+00 : f32
      %26 = vector.broadcast %cst_11 : f32 to vector<8x128xf32>
      %27 = arith.maximumf %4, %26 : vector<8x128xf32>
      %28 = arith.mulf %4, %6 : vector<8x128xf32>
      %29 = arith.subf %27, %28 : vector<8x128xf32>
      %30 = arith.addf %29, %25 : vector<8x128xf32>
      %cst_12 = arith.constant 1.000000e+00 : f32
      %31 = vector.broadcast %cst_12 : f32 to vector<8x128xf32>
      %32 = arith.addf %31, %24 : vector<8x128xf32>
      %33 = tpu.reciprocal %32 {approx = true} : vector<8x128xf32> -> vector<8x128xf32>
      %cst_13 = arith.constant 0.000000e+00 : f32
      %34 = vector.broadcast %cst_13 : f32 to vector<8x128xf32>
      %35 = arith.cmpf oge, %4, %34 : vector<8x128xf32>
      %36 = arith.mulf %24, %33 : vector<8x128xf32>
      %37 = arith.select %35, %33, %36 : vector<8x128xi1>, vector<8x128xf32>
      %c0_14 = arith.constant 0 : index
      %c0_15 = arith.constant 0 : index
      %38 = vector.load %arg6[%c0_14, %c0_15] : memref<8x128xf32, #tpu.memory_space<vmem>>, vector<8x128xf32>
      %39 = vector.shape_cast %30 : vector<8x128xf32> to vector<1x8x128xf32>
      %cst_16 = arith.constant dense<0.000000e+00> : vector<8x128xf32>
      %40 = vector.multi_reduction <add>, %39, %cst_16 [0] : vector<1x8x128xf32> to vector<8x128xf32>
      %41 = arith.addf %38, %40 : vector<8x128xf32>
      %c0_17 = arith.constant 0 : index
      %c0_18 = arith.constant 0 : index
      %42 = vector.load %arg6[%c0_17, %c0_18] : memref<8x128xf32, #tpu.memory_space<vmem>>, vector<8x128xf32>
      tpu.vector_store %arg6[%c0_17, %c0_18], %41 {strides = array<i32>} : memref<8x128xf32, #tpu.memory_space<vmem>>, vector<8x128xf32>,
      %c0_19 = arith.constant 0 : index
      %c0_20 = arith.constant 0 : index
      %43 = vector.load %arg7[%c0_19, %c0_20] : memref<8x128xf32, #tpu.memory_space<vmem>>, vector<8x128xf32>
      %44 = arith.mulf %37, %6 : vector<8x128xf32>
      %45 = vector.shape_cast %44 : vector<8x128xf32> to vector<1x8x128xf32>
      %cst_21 = arith.constant dense<0.000000e+00> : vector<8x128xf32>
      %46 = vector.multi_reduction <add>, %45, %cst_21 [0] : vector<1x8x128xf32> to vector<8x128xf32>
      %47 = arith.addf %43, %46 : vector<8x128xf32>
      %c0_22 = arith.constant 0 : index
      %c0_23 = arith.constant 0 : index
      %48 = vector.load %arg7[%c0_22, %c0_23] : memref<8x128xf32, #tpu.memory_space<vmem>>, vector<8x128xf32>
      tpu.vector_store %arg7[%c0_22, %c0_23], %47 {strides = array<i32>} : memref<8x128xf32, #tpu.memory_space<vmem>>, vector<8x128xf32>,
      %c0_24 = arith.constant 0 : index
      %c0_25 = arith.constant 0 : index
      %49 = vector.load %arg8[%c0_24, %c0_25] : memref<8x128xf32, #tpu.memory_space<vmem>>, vector<8x128xf32>
      %50 = vector.shape_cast %37 : vector<8x128xf32> to vector<1x8x128xf32>
      %cst_26 = arith.constant dense<0.000000e+00> : vector<8x128xf32>
      %51 = vector.multi_reduction <add>, %50, %cst_26 [0] : vector<1x8x128xf32> to vector<8x128xf32>
      %52 = arith.addf %49, %51 : vector<8x128xf32>
      %c0_27 = arith.constant 0 : index
      %c0_28 = arith.constant 0 : index
      %53 = vector.load %arg8[%c0_27, %c0_28] : memref<8x128xf32, #tpu.memory_space<vmem>>, vector<8x128xf32>
      tpu.vector_store %arg8[%c0_27, %c0_28], %52 {strides = array<i32>} : memref<8x128xf32, #tpu.memory_space<vmem>>, vector<8x128xf32>,
      %c0_29 = arith.constant 0 : index
      %c0_30 = arith.constant 0 : index
      %54 = vector.load %arg9[%c0_29, %c0_30] : memref<8x128xf32, #tpu.memory_space<vmem>>, vector<8x128xf32>
      %55 = vector.shape_cast %6 : vector<8x128xf32> to vector<1x8x128xf32>
      %cst_31 = arith.constant dense<0.000000e+00> : vector<8x128xf32>
      %56 = vector.multi_reduction <add>, %55, %cst_31 [0] : vector<1x8x128xf32> to vector<8x128xf32>
      %57 = arith.addf %54, %56 : vector<8x128xf32>
      %c0_32 = arith.constant 0 : index
      %c0_33 = arith.constant 0 : index
      %58 = vector.load %arg9[%c0_32, %c0_33] : memref<8x128xf32, #tpu.memory_space<vmem>>, vector<8x128xf32>
      tpu.vector_store %arg9[%c0_32, %c0_33], %57 {strides = array<i32>} : memref<8x128xf32, #tpu.memory_space<vmem>>, vector<8x128xf32>,
    } else {
    }
    %16 = arith.extui %12 : i1 to i32
    %c0_i32_8 = arith.constant 0 : i32
    %17 = arith.cmpi ne, %16, %c0_i32_8 : i32
    scf.if %17 {
      %21 = tpu.iota {dimensions = array<i32: 0>} : vector<8x128xi32>
      %22 = tpu.iota {dimensions = array<i32: 1>} : vector<8x128xi32>
      %23 = vector.broadcast %9 : i32 to vector<8x128xi32>
      %24 = arith.addi %23, %21 : vector<8x128xi32>
      %c128_i32_11 = arith.constant 128 : i32
      %25 = vector.broadcast %c128_i32_11 : i32 to vector<8x128xi32>
      %26 = arith.muli %24, %25 : vector<8x128xi32>
      %27 = arith.addi %26, %22 : vector<8x128xi32>
      %c1024_i32_12 = arith.constant 1024 : i32
      %28 = vector.broadcast %c1024_i32_12 : i32 to vector<8x128xi32>
      %29 = arith.cmpi slt, %27, %28 : vector<8x128xi32>
      %cst = arith.constant -1.000000e+04 : f32
      %30 = vector.broadcast %cst : f32 to vector<8x128xf32>
      %31 = arith.select %29, %4, %30 : vector<8x128xi1>, vector<8x128xf32>
      %cst_13 = arith.constant 0.000000e+00 : f32
      %32 = vector.broadcast %cst_13 : f32 to vector<8x128xf32>
      %33 = arith.select %29, %6, %32 : vector<8x128xi1>, vector<8x128xf32>
      %34 = math.absf %31 : vector<8x128xf32>
      %cst_14 = arith.constant 0.000000e+00 : f32
      %35 = vector.broadcast %cst_14 : f32 to vector<8x128xf32>
      %36 = arith.subf %35, %34 : vector<8x128xf32>
      %37 = math.exp %36 : vector<8x128xf32>
      %38 = math.log1p %37 : vector<8x128xf32>
      %cst_15 = arith.constant 0.000000e+00 : f32
      %39 = vector.broadcast %cst_15 : f32 to vector<8x128xf32>
      %40 = arith.maximumf %31, %39 : vector<8x128xf32>
      %41 = arith.mulf %31, %33 : vector<8x128xf32>
      %42 = arith.subf %40, %41 : vector<8x128xf32>
      %43 = arith.addf %42, %38 : vector<8x128xf32>
      %cst_16 = arith.constant 1.000000e+00 : f32
      %44 = vector.broadcast %cst_16 : f32 to vector<8x128xf32>
      %45 = arith.addf %44, %37 : vector<8x128xf32>
      %46 = tpu.reciprocal %45 {approx = true} : vector<8x128xf32> -> vector<8x128xf32>
      %cst_17 = arith.constant 0.000000e+00 : f32
      %47 = vector.broadcast %cst_17 : f32 to vector<8x128xf32>
      %48 = arith.cmpf oge, %31, %47 : vector<8x128xf32>
      %49 = arith.mulf %37, %46 : vector<8x128xf32>
      %50 = arith.select %48, %46, %49 : vector<8x128xi1>, vector<8x128xf32>
      %c0_18 = arith.constant 0 : index
      %c0_19 = arith.constant 0 : index
      %51 = vector.load %arg6[%c0_18, %c0_19] : memref<8x128xf32, #tpu.memory_space<vmem>>, vector<8x128xf32>
      %52 = vector.shape_cast %43 : vector<8x128xf32> to vector<1x8x128xf32>
      %cst_20 = arith.constant dense<0.000000e+00> : vector<8x128xf32>
      %53 = vector.multi_reduction <add>, %52, %cst_20 [0] : vector<1x8x128xf32> to vector<8x128xf32>
      %54 = arith.addf %51, %53 : vector<8x128xf32>
      %c0_21 = arith.constant 0 : index
      %c0_22 = arith.constant 0 : index
      %55 = vector.load %arg6[%c0_21, %c0_22] : memref<8x128xf32, #tpu.memory_space<vmem>>, vector<8x128xf32>
      tpu.vector_store %arg6[%c0_21, %c0_22], %54 {strides = array<i32>} : memref<8x128xf32, #tpu.memory_space<vmem>>, vector<8x128xf32>,
      %c0_23 = arith.constant 0 : index
      %c0_24 = arith.constant 0 : index
      %56 = vector.load %arg7[%c0_23, %c0_24] : memref<8x128xf32, #tpu.memory_space<vmem>>, vector<8x128xf32>
      %57 = arith.mulf %50, %33 : vector<8x128xf32>
      %58 = vector.shape_cast %57 : vector<8x128xf32> to vector<1x8x128xf32>
      %cst_25 = arith.constant dense<0.000000e+00> : vector<8x128xf32>
      %59 = vector.multi_reduction <add>, %58, %cst_25 [0] : vector<1x8x128xf32> to vector<8x128xf32>
      %60 = arith.addf %56, %59 : vector<8x128xf32>
      %c0_26 = arith.constant 0 : index
      %c0_27 = arith.constant 0 : index
      %61 = vector.load %arg7[%c0_26, %c0_27] : memref<8x128xf32, #tpu.memory_space<vmem>>, vector<8x128xf32>
      tpu.vector_store %arg7[%c0_26, %c0_27], %60 {strides = array<i32>} : memref<8x128xf32, #tpu.memory_space<vmem>>, vector<8x128xf32>,
      %c0_28 = arith.constant 0 : index
      %c0_29 = arith.constant 0 : index
      %62 = vector.load %arg8[%c0_28, %c0_29] : memref<8x128xf32, #tpu.memory_space<vmem>>, vector<8x128xf32>
      %63 = vector.shape_cast %50 : vector<8x128xf32> to vector<1x8x128xf32>
      %cst_30 = arith.constant dense<0.000000e+00> : vector<8x128xf32>
      %64 = vector.multi_reduction <add>, %63, %cst_30 [0] : vector<1x8x128xf32> to vector<8x128xf32>
      %65 = arith.addf %62, %64 : vector<8x128xf32>
      %c0_31 = arith.constant 0 : index
      %c0_32 = arith.constant 0 : index
      %66 = vector.load %arg8[%c0_31, %c0_32] : memref<8x128xf32, #tpu.memory_space<vmem>>, vector<8x128xf32>
      tpu.vector_store %arg8[%c0_31, %c0_32], %65 {strides = array<i32>} : memref<8x128xf32, #tpu.memory_space<vmem>>, vector<8x128xf32>,
      %c0_33 = arith.constant 0 : index
      %c0_34 = arith.constant 0 : index
      %67 = vector.load %arg9[%c0_33, %c0_34] : memref<8x128xf32, #tpu.memory_space<vmem>>, vector<8x128xf32>
      %68 = vector.shape_cast %33 : vector<8x128xf32> to vector<1x8x128xf32>
      %cst_35 = arith.constant dense<0.000000e+00> : vector<8x128xf32>
      %69 = vector.multi_reduction <add>, %68, %cst_35 [0] : vector<1x8x128xf32> to vector<8x128xf32>
      %70 = arith.addf %67, %69 : vector<8x128xf32>
      %c0_36 = arith.constant 0 : index
      %c0_37 = arith.constant 0 : index
      %71 = vector.load %arg9[%c0_36, %c0_37] : memref<8x128xf32, #tpu.memory_space<vmem>>, vector<8x128xf32>
      tpu.vector_store %arg9[%c0_36, %c0_37], %70 {strides = array<i32>} : memref<8x128xf32, #tpu.memory_space<vmem>>, vector<8x128xf32>,
    } else {
    }
    %c0_i32_9 = arith.constant 0 : i32
    %18 = arith.cmpi eq, %arg2, %c0_i32_9 : i32
    %19 = arith.extui %18 : i1 to i32
    %c0_i32_10 = arith.constant 0 : i32
    %20 = arith.cmpi ne, %19, %c0_i32_10 : i32
    scf.if %20 {
      %c0_11 = arith.constant 0 : index
      %c0_12 = arith.constant 0 : index
      %21 = vector.load %arg6[%c0_11, %c0_12] : memref<8x128xf32, #tpu.memory_space<vmem>>, vector<8x128xf32>
      %c0_13 = arith.constant 0 : index
      %c0_14 = arith.constant 0 : index
      %c0_15 = arith.constant 0 : index
      %c0_16 = arith.constant 0 : index
      %c0_17 = arith.constant 0 : index
      %22 = vector.load %arg5[%c0_13, %c0_14, %c0_15, %c0_16, %c0_17] : memref<1x1x4x8x128xf32, #tpu.memory_space<vmem>>, vector<1x1x1x8x128xf32>
      %23 = vector.shape_cast %22 : vector<1x1x1x8x128xf32> to vector<8x128xf32>
      %24 = vector.shape_cast %21 : vector<8x128xf32> to vector<1x1x1x8x128xf32>
      tpu.vector_store %arg5[%c0_13, %c0_14, %c0_15, %c0_16, %c0_17], %24 {strides = array<i32>} : memref<1x1x4x8x128xf32, #tpu.memory_space<vmem>>, vector<1x1x1x8x128xf32>,
      %c0_18 = arith.constant 0 : index
      %c0_19 = arith.constant 0 : index
      %25 = vector.load %arg7[%c0_18, %c0_19] : memref<8x128xf32, #tpu.memory_space<vmem>>, vector<8x128xf32>
      %c0_20 = arith.constant 0 : index
      %c0_21 = arith.constant 0 : index
      %c1 = arith.constant 1 : index
      %c0_22 = arith.constant 0 : index
      %c0_23 = arith.constant 0 : index
      %26 = vector.load %arg5[%c0_20, %c0_21, %c1, %c0_22, %c0_23] : memref<1x1x4x8x128xf32, #tpu.memory_space<vmem>>, vector<1x1x1x8x128xf32>
      %27 = vector.shape_cast %26 : vector<1x1x1x8x128xf32> to vector<8x128xf32>
      %28 = vector.shape_cast %25 : vector<8x128xf32> to vector<1x1x1x8x128xf32>
      tpu.vector_store %arg5[%c0_20, %c0_21, %c1, %c0_22, %c0_23], %28 {strides = array<i32>} : memref<1x1x4x8x128xf32, #tpu.memory_space<vmem>>, vector<1x1x1x8x128xf32>,
      %c0_24 = arith.constant 0 : index
      %c0_25 = arith.constant 0 : index
      %29 = vector.load %arg8[%c0_24, %c0_25] : memref<8x128xf32, #tpu.memory_space<vmem>>, vector<8x128xf32>
      %c0_26 = arith.constant 0 : index
      %c0_27 = arith.constant 0 : index
      %c2 = arith.constant 2 : index
      %c0_28 = arith.constant 0 : index
      %c0_29 = arith.constant 0 : index
      %30 = vector.load %arg5[%c0_26, %c0_27, %c2, %c0_28, %c0_29] : memref<1x1x4x8x128xf32, #tpu.memory_space<vmem>>, vector<1x1x1x8x128xf32>
      %31 = vector.shape_cast %30 : vector<1x1x1x8x128xf32> to vector<8x128xf32>
      %32 = vector.shape_cast %29 : vector<8x128xf32> to vector<1x1x1x8x128xf32>
      tpu.vector_store %arg5[%c0_26, %c0_27, %c2, %c0_28, %c0_29], %32 {strides = array<i32>} : memref<1x1x4x8x128xf32, #tpu.memory_space<vmem>>, vector<1x1x1x8x128xf32>,
      %c0_30 = arith.constant 0 : index
      %c0_31 = arith.constant 0 : index
      %33 = vector.load %arg9[%c0_30, %c0_31] : memref<8x128xf32, #tpu.memory_space<vmem>>, vector<8x128xf32>
      %c0_32 = arith.constant 0 : index
      %c0_33 = arith.constant 0 : index
      %c3 = arith.constant 3 : index
      %c0_34 = arith.constant 0 : index
      %c0_35 = arith.constant 0 : index
      %34 = vector.load %arg5[%c0_32, %c0_33, %c3, %c0_34, %c0_35] : memref<1x1x4x8x128xf32, #tpu.memory_space<vmem>>, vector<1x1x1x8x128xf32>
      %35 = vector.shape_cast %34 : vector<1x1x1x8x128xf32> to vector<8x128xf32>
      %36 = vector.shape_cast %33 : vector<8x128xf32> to vector<1x1x1x8x128xf32>
      tpu.vector_store %arg5[%c0_32, %c0_33, %c3, %c0_34, %c0_35], %36 {strides = array<i32>} : memref<1x1x4x8x128xf32, #tpu.memory_space<vmem>>, vector<1x1x1x8x128xf32>,
    } else {
    }
    return
  }
  func.func @transform_0(%arg0: i32, %arg1: i32, %arg2: i32) -> (i32, i32, i32) {
    %c1_i32 = arith.constant 1 : i32
    %0 = arith.muli %arg1, %c1_i32 : i32
    %1 = arith.addi %0, %arg2 : i32
    %c0_i32 = arith.constant 0 : i32
    %2 = arith.minsi %1, %c0_i32 : i32
    %c0_i32_0 = arith.constant 0 : i32
    %c0_i32_1 = arith.constant 0 : i32
    return %arg0, %2, %c0_i32_0 : i32, i32, i32
  }
  func.func @transform_1(%arg0: i32, %arg1: i32, %arg2: i32) -> (i32, i32, i32) {
    %c1_i32 = arith.constant 1 : i32
    %0 = arith.muli %arg1, %c1_i32 : i32
    %1 = arith.addi %0, %arg2 : i32
    %c0_i32 = arith.constant 0 : i32
    %2 = arith.minsi %1, %c0_i32 : i32
    %c0_i32_0 = arith.constant 0 : i32
    %c0_i32_1 = arith.constant 0 : i32
    return %arg0, %2, %c0_i32_0 : i32, i32, i32
  }
  func.func @transform_2(%arg0: i32, %arg1: i32, %arg2: i32) -> (i32, i32, i32, i32, i32) {
    %c0_i32 = arith.constant 0 : i32
    %c0_i32_0 = arith.constant 0 : i32
    %c0_i32_1 = arith.constant 0 : i32
    %c0_i32_2 = arith.constant 0 : i32
    return %arg0, %arg1, %c0_i32, %c0_i32_0, %c0_i32_1 : i32, i32, i32, i32, i32
  }
}

</mosaic_0001>

<llo_original>
// kernel: tpu_custom_call.1
$region0: #{tpu_custom_call.1}
  #allocation0 [shape = 'u32[]', space=smem, size = 0x4, offset = 0x4, fixed_abs, tag = 'smem constant byte address 0x4 - core index']
  #allocation1 [shape = 'u32[144,128]{1,0:T(1,128)}', space=vmem, size = 0x12000, scoped, tag = 'internal scratch']
  #allocation2 [shape = 'f32[8,128]{1,0:T(8,128)}', space=vmem, size = 0x1000, scoped, tag = 'scratch operand']
  #allocation3 [shape = 'f32[8,128]{1,0:T(8,128)}', space=vmem, size = 0x1000, scoped, tag = 'scratch operand']
  #allocation4 [shape = 'f32[8,128]{1,0:T(8,128)}', space=vmem, size = 0x1000, scoped, tag = 'scratch operand']
  #allocation5 [shape = 'f32[8,128]{1,0:T(8,128)}', space=vmem, size = 0x1000, scoped, tag = 'scratch operand']
  %s0 = inlined_call_operand.hbm [shape: f32[2,8,128], index: 0, kind: input, shape index: {}]
  %s1 = inlined_call_operand.hbm [shape: f32[2,8,128], index: 1, kind: input, shape index: {}]
  %s2 = inlined_call_operand.hbm [shape: f32[2,1,4,8,128], index: 2, kind: output, shape index: {}]
  %s3 = sld [smem:[#allocation0]]
  $region65: #{tpu_custom_call.1} parent=0
    _
  %s5 = ssub.s32 1, %s3
  %s6 = scalar_select 0, %s5, %s3
  $region1: #{tpu_custom_call.1} parent=0
    #allocation6 [shape = 'u8[8192]{0}', space=vmem, size = 0x2000, scoped, tag = 'input window, operand 0']
    #allocation7 [shape = 's32[2]{0}', space=sflag, size = 0x8, scoped, tag = 'scoped memory for tpu_custom_call.1']
    #allocation8 [shape = 's32[2]{0}', space=sflag, size = 0x8, scoped, tag = 'scoped memory for tpu_custom_call.1']
    #allocation9 [shape = 'u8[8192]{0}', space=vmem, size = 0x2000, scoped, tag = 'input window, operand 1']
    #allocation10 [shape = 's32[2]{0}', space=sflag, size = 0x8, scoped, tag = 'scoped memory for tpu_custom_call.1']
    #allocation11 [shape = 'u8[32768]{0}', space=vmem, size = 0x8000, scoped, tag = 'output window, operand 0']
    %7 = vsyncpa [#allocation7], 0
    %s8 = scalar_lea.sflag [#allocation7], 1
    %9 = vsyncpa %s8, 0
    %10 = vsyncpa [#allocation10], 0
    %s11 = scalar_lea.sflag [#allocation10], 1
    %12 = vsyncpa %s11, 0
    %13 = vsyncpa [#allocation8], 0
    %s14 = scalar_lea.sflag [#allocation8], 1
    %15 = vsyncpa %s14, 0
    loop: start=0, step=1, limit=4
    $region2: #{tpu_custom_call.1} parent=1 // loop_pre_header
      _
    $region3: #{tpu_custom_call.1} parent=1 // loop_header
      %s17 = sphi 0, %s21
      %p18 = scmp.ge.s32.totalorder %s17, 4
      %s24 = sphi 0, %s43
      %s25 = sphi 0, %s39
      %s26 = sphi 0, %s35
      %s27 = sphi 0, %s24
      %s28 = sphi 0, %s25
      %s29 = sphi 0, %s26
      %s30 = sphi 0, %s27
      %s31 = sphi 0, %s28
      %s32 = sphi 0, %s29
      %s54 = sphi 0, %s56
      %s57 = sphi 0, %s54
      %s58 = sphi 0, %s57
      %s74 = sphi 0, %s58
      %s88 = sphi 0, %s90
      %s91 = sphi 0, %s88
      %s92 = sphi 0, %s91
      %s108 = sphi 0, %s92
      %s116 = sphi 0, %s118
      %s119 = sphi 0, %s116
      %s120 = sphi 0, %s119
      %s136 = sphi 0, %s120
    $region4: #{tpu_custom_call.1} parent=1 // loop_header_branch
      %20 = sbr.rel (%p18) target = $region8
    $region5: #{tpu_custom_call.1} parent=1 // loop_body
      %s22 = ssub.s32 %s17, 1
      %s23 = ssub.s32 %s17, 2
      %s33 = sadd.s32 1, %s26
      %p34 = scmp.ge.s32.totalorder %s33, 1
      %s35 = scalar_select %p34, 0, %s33
      %s36 = sadd.s32 1, %s25
      %s37 = scalar_select %p34, %s36, %s25
      %p38 = scmp.ge.s32.totalorder %s37, 1
      %s39 = scalar_select %p38, 0, %s37
      %s40 = sadd.s32 1, %s24
      %s41 = scalar_select %p38, %s40, %s24
      %p42 = scmp.ge.s32.totalorder %s41, 2
      %s43 = scalar_select %p42, 0, %s41
      %s44 = sadd.s32 %s25, %s26
      %p45 = scmp.lt.s32.totalorder %s44, 0
      %s46 = scalar_select %p45, %s44, 0
      %s47 = sadd.s32 %s39, %s35
      %p48 = scmp.lt.s32.totalorder %s47, 0
      %s49 = scalar_select %p48, %s47, 0
      %s50 = ssub.s32 %s24, %s43
      %s51 = ssub.s32 %s46, %s49
      %s52 = sor.u32 %s50, %s51
      %p53 = scmp.eq.s32.totalorder %s52, 0
      %s55 = sadd.s32 %s54, 1
      %s56 = scalar_select %p53, %s54, %s55
      %p59 = pneg %p53
      %p60 = scmp.eq.s32.totalorder %s17, 1
      %p61 = por %p59, %p60
      %p62 = scmp.ne.s32.totalorder %s54, %s57
      %p63 = scmp.eq.s32.totalorder %s17, 0
      %p64 = por %p62, %p63
      %p65 = scmp.ne.s32.totalorder %s54, %s57
      %p66 = scmp.eq.s32.totalorder %s22, 1
      %p67 = por %p65, %p66
      %p68 = scmp.ne.s32.totalorder %s57, %s58
      %p69 = scmp.eq.s32.totalorder %s22, 0
      %p70 = por %p68, %p69
      %p71 = scmp.ne.s32.totalorder %s57, %s58
      %p72 = scmp.eq.s32.totalorder %s23, 1
      %p73 = por %p71, %p72
      %p75 = scmp.ne.s32.totalorder %s58, %s74
      %p76 = scmp.eq.s32.totalorder %s23, 0
      %p77 = por %p75, %p76
      %s78 = sadd.s32 %s25, %s26
      %p79 = scmp.lt.s32.totalorder %s78, 0
      %s80 = scalar_select %p79, %s78, 0
      %s81 = sadd.s32 %s39, %s35
      %p82 = scmp.lt.s32.totalorder %s81, 0
      %s83 = scalar_select %p82, %s81, 0
      %s84 = ssub.s32 %s24, %s43
      %s85 = ssub.s32 %s80, %s83
      %s86 = sor.u32 %s84, %s85
      %p87 = scmp.eq.s32.totalorder %s86, 0
      %s89 = sadd.s32 %s88, 1
      %s90 = scalar_select %p87, %s88, %s89
      %p93 = pneg %p87
      %p94 = scmp.eq.s32.totalorder %s17, 1
      %p95 = por %p93, %p94
      %p96 = scmp.ne.s32.totalorder %s88, %s91
      %p97 = scmp.eq.s32.totalorder %s17, 0
      %p98 = por %p96, %p97
      %p99 = scmp.ne.s32.totalorder %s88, %s91
      %p100 = scmp.eq.s32.totalorder %s22, 1
      %p101 = por %p99, %p100
      %p102 = scmp.ne.s32.totalorder %s91, %s92
      %p103 = scmp.eq.s32.totalorder %s22, 0
      %p104 = por %p102, %p103
      %p105 = scmp.ne.s32.totalorder %s91, %s92
      %p106 = scmp.eq.s32.totalorder %s23, 1
      %p107 = por %p105, %p106
      %p109 = scmp.ne.s32.totalorder %s92, %s108
      %p110 = scmp.eq.s32.totalorder %s23, 0
      %p111 = por %p109, %p110
      %s112 = ssub.s32 %s24, %s43
      %s113 = ssub.s32 %s25, %s39
      %s114 = sor.u32 %s112, %s113
      %p115 = scmp.eq.s32.totalorder %s114, 0
      %s117 = sadd.s32 %s116, 1
      %s118 = scalar_select %p115, %s116, %s117
      %p121 = pneg %p115
      %p122 = scmp.eq.s32.totalorder %s17, 1
      %p123 = por %p121, %p122
      %p124 = scmp.ne.s32.totalorder %s116, %s119
      %p125 = scmp.eq.s32.totalorder %s17, 0
      %p126 = por %p124, %p125
      %p127 = scmp.ne.s32.totalorder %s116, %s119
      %p128 = scmp.eq.s32.totalorder %s22, 1
      %p129 = por %p127, %p128
      %p130 = scmp.ne.s32.totalorder %s119, %s120
      %p131 = scmp.eq.s32.totalorder %s22, 0
      %p132 = por %p130, %p131
      %p133 = scmp.ne.s32.totalorder %s119, %s120
      %p134 = scmp.eq.s32.totalorder %s23, 1
      %p135 = por %p133, %p134
      %p137 = scmp.ne.s32.totalorder %s120, %s136
      %p138 = scmp.eq.s32.totalorder %s23, 0
      %p139 = por %p137, %p138
      %p140 = scmp.le.s32.totalorder 1, %s17
      %p141 = scmp.lt.s32.totalorder %s17, 3
      %p142 = pnand %p140, %p141
      %p143 = pneg %p142
      // Predicated region
      $region9: #{tpu_custom_call.1} parent=5 // pred_check
        _
      $region10: #{tpu_custom_call.1} parent=5 // pred_check_branch
        %145 = sbr.rel (%p142) target = $region12
      $region11: #{tpu_custom_call.1} parent=5 // pred_region
        %s146 = ssub.s32 %s17, 1
      $region12: #{tpu_custom_call.1} parent=5 // pred_fallthru
        _
      %p147 = scmp.lt.s32.totalorder %s17, 2
      // Predicated region
      $region13: #{tpu_custom_call.1} parent=5 // pred_check
        %p148 = pneg %p147
      $region14: #{tpu_custom_call.1} parent=5 // pred_check_branch
        %150 = sbr.rel (%p148) target = $region16
      $region15: #{tpu_custom_call.1} parent=5 // pred_region
        // Predicated region
        $region17: #{tpu_custom_call.1} parent=15 // pred_check
          %p151 = pneg %p64
        $region18: #{tpu_custom_call.1} parent=15 // pred_check_branch
          %153 = sbr.rel (%p151) target = $region20
        $region19: #{tpu_custom_call.1} parent=15 // pred_region
          %s154 = sand.u32 %s54, 1
          %s155 = scalar_lea.sflag [#allocation7], %s154
          %s156 = sand.u32 %s54, 1
          %s157 = smul.addr %s156, 8
          %s158 = scalar_lea.vmem [#allocation6], %s157
          %s159 = sadd.s32 %s25, %s26
          %p160 = scmp.lt.s32.totalorder %s159, 0
          %s161 = scalar_select %p160, %s159, 0
          %s163 = ssub.s32 128, 128
          %164 = vsyncadd %s155, %s163
          %s165 = sadd.s32 %s161, %s24
          %s166 = smul.addr %s165, 128
          %s167 = scalar_lea.hbm %s0, %s166
          %s169 = sshll.u32 %s158, 4
          %s170 = int_to_ptr.vmem [resolvable:$true] %s169
          %172 = dma.hbm_to_vmem [thread:$0]  %s167, 128, %s170, %s155
        $region20: #{tpu_custom_call.1} parent=15 // pred_fallthru
          _
        // Predicated region
        $region21: #{tpu_custom_call.1} parent=15 // pred_check
          %p173 = pneg %p98
        $region22: #{tpu_custom_call.1} parent=15 // pred_check_branch
          %175 = sbr.rel (%p173) target = $region24
        $region23: #{tpu_custom_call.1} parent=15 // pred_region
          %s176 = sand.u32 %s88, 1
          %s177 = scalar_lea.sflag [#allocation10], %s176
          %s178 = sand.u32 %s88, 1
          %s179 = smul.addr %s178, 8
          %s180 = scalar_lea.vmem [#allocation9], %s179
          %s181 = sadd.s32 %s25, %s26
          %p182 = scmp.lt.s32.totalorder %s181, 0
          %s183 = scalar_select %p182, %s181, 0
          %s185 = ssub.s32 128, 128
          %186 = vsyncadd %s177, %s185
          %s187 = sadd.s32 %s183, %s24
          %s188 = smul.addr %s187, 128
          %s189 = scalar_lea.hbm %s1, %s188
          %s191 = sshll.u32 %s180, 4
          %s192 = int_to_ptr.vmem [resolvable:$true] %s191
          %194 = dma.hbm_to_vmem [thread:$0]  %s189, 128, %s192, %s177
        $region24: #{tpu_custom_call.1} parent=15 // pred_fallthru
          _
      $region16: #{tpu_custom_call.1} parent=5 // pred_fallthru
        _
      %p195 = scmp.le.s32.totalorder 1, %s17
      %p196 = scmp.lt.s32.totalorder %s17, 3
      %p197 = pnand %p195, %p196
      %p198 = pneg %p197
      // Predicated region
      $region25: #{tpu_custom_call.1} parent=5 // pred_check
        _
      $region26: #{tpu_custom_call.1} parent=5 // pred_check_branch
        %200 = sbr.rel (%p197) target = $region28
      $region27: #{tpu_custom_call.1} parent=5 // pred_region
        %s201 = ssub.s32 %s17, 1
        %s202 = sand.u32 %s57, 1
        %s203 = scalar_lea.sflag [#allocation7], %s202
        %s204 = sand.u32 %s57, 1
        %s205 = smul.addr %s204, 8
        %s206 = scalar_lea.vmem [#allocation6], %s205
        // Predicated region
        $region29: #{tpu_custom_call.1} parent=27 // pred_check
          %p207 = pneg %p70
        $region30: #{tpu_custom_call.1} parent=27 // pred_check_branch
          %209 = sbr.rel (%p207) target = $region32
        $region31: #{tpu_custom_call.1} parent=27 // pred_region
          %210 = dma.done %s203, 128
        $region32: #{tpu_custom_call.1} parent=27 // pred_fallthru
          _
        %s211 = sand.u32 %s91, 1
        %s212 = scalar_lea.sflag [#allocation10], %s211
        %s213 = sand.u32 %s91, 1
        %s214 = smul.addr %s213, 8
        %s215 = scalar_lea.vmem [#allocation9], %s214
        // Predicated region
        $region33: #{tpu_custom_call.1} parent=27 // pred_check
          %p216 = pneg %p104
        $region34: #{tpu_custom_call.1} parent=27 // pred_check_branch
          %218 = sbr.rel (%p216) target = $region36
        $region35: #{tpu_custom_call.1} parent=27 // pred_region
          %219 = dma.done %s212, 128
        $region36: #{tpu_custom_call.1} parent=27 // pred_fallthru
          _
        %s220 = sand.u32 %s57, 1
        %s221 = scalar_lea.sflag [#allocation7], %s220
        %s222 = sand.u32 %s57, 1
        %s223 = smul.addr %s222, 8
        %s224 = scalar_lea.vmem [#allocation6], %s223
        %p225 = pneg %p70
        %p226 = pneg %p67
        %s227 = sand.u32 %s91, 1
        %s228 = scalar_lea.sflag [#allocation10], %s227
        %s229 = sand.u32 %s91, 1
        %s230 = smul.addr %s229, 8
        %s231 = scalar_lea.vmem [#allocation9], %s230
        %p232 = pneg %p104
        %p233 = pneg %p101
        %p234 = pneg %p132
        %p235 = pneg %p129
        %s236 = sand.u32 %s119, 1
        %s237 = scalar_lea.sflag [#allocation8], %s236
        %s238 = sand.u32 %s119, 1
        %s239 = smul.addr %s238, 32
        %s240 = scalar_lea.vmem [#allocation11], %s239
        %s241 = sadd.s32 %s28, %s29
        %p242 = scmp.lt.s32.totalorder %s241, 0
        %s243 = scalar_select %p242, %s241, 0
        %s244 = sadd.s32 %s28, %s29
        %p245 = scmp.lt.s32.totalorder %s244, 0
        %s246 = scalar_select %p245, %s244, 0
        %p247 = scmp.eq.s32.totalorder %s29, 0
        // Predicated region
        $region37: #{tpu_custom_call.1} parent=27 // pred_check
          %p248 = pneg %p247
        $region38: #{tpu_custom_call.1} parent=27 // pred_check_branch
          %250 = sbr.rel (%p248) target = $region40
        $region39: #{tpu_custom_call.1} parent=27 // pred_region
          %251 = vst [vmem:[#allocation2] sm:$0xff] 0.0
          %252 = vst [vmem:[#allocation3] sm:$0xff] 0.0
          %253 = vst [vmem:[#allocation4] sm:$0xff] 0.0
          %254 = vst [vmem:[#allocation5] sm:$0xff] 0.0
        $region40: #{tpu_custom_call.1} parent=27 // pred_fallthru
          _
        %v255 = vld [vmem:[%s206] sm:$0xff]
        %v256 = vld [vmem:[%s215] sm:$0xff]
        %s257 = sadd.s32 %s28, %s29
        %s258 = smul.u32 %s257, 8
        %s259 = sadd.s32 %s258, 8
        %s260 = smul.u32 %s259, 128
        %p261 = scmp.gt.s32.totalorder %s260, 1024
        %p262 = scmp.le.s32.totalorder %s260, 1024
        // Predicated region
        $region41: #{tpu_custom_call.1} parent=27 // pred_check
          %p263 = pneg %p262
        $region42: #{tpu_custom_call.1} parent=27 // pred_check_branch
          %265 = sbr.rel (%p263) target = $region44
        $region43: #{tpu_custom_call.1} parent=27 // pred_region
          %v266 = vand.u32 2147483647, %v255
          %v267 = vsub.f32 0.0, %v266
          %v268 = vmul.f32 %v267, 1.442695
          %v269 = vpow.pop %v268
          %v270 = vadd.f32 %v269, 1.0
          %v271 = vlog2.pop %v270
          %v272 = vmul.f32 %v271, 0.6931472
          %v273 = vmul.f32 -0.5, %v269
          %v274 = vadd.f32 %v273, 1.0
          %v275 = vmul.f32 %v274, %v269
          %v276 = vand.u32 2147483647, %v269
          %vm277 = vcmp.lt.f32.partialorder %v276, 0.0004427343
          %v278 = vsel %vm277, %v275, %v272
          %v279 = vmax.f32 %v255, 0.0
          %v280 = vmul.f32 %v255, %v256
          %v281 = vsub.f32 %v279, %v280
          %v282 = vadd.f32 %v281, %v278
          %v283 = vadd.f32 %v269, 1.0
          %v284 = vrcp.pop %v283
          %vm285 = vcmp.ge.f32.partialorder %v255, 0.0
          %v286 = vmul.f32 %v269, %v284
          %v287 = vsel %vm285, %v284, %v286
          %v288 = vld [vmem:[#allocation2] sm:$0xff]
          %v289 = vadd.f32 %v282, 0.0
          %v290 = vadd.f32 %v288, %v289
          %291 = vst [vmem:[#allocation2] sm:$0xff] %v290
          %v292 = vld [vmem:[#allocation3] sm:$0xff]
          %v293 = vmul.f32 %v287, %v256
          %v294 = vadd.f32 %v293, 0.0
          %v295 = vadd.f32 %v292, %v294
          %296 = vst [vmem:[#allocation3] sm:$0xff] %v295
          %v297 = vld [vmem:[#allocation4] sm:$0xff]
          %v298 = vadd.f32 %v287, 0.0
          %v299 = vadd.f32 %v297, %v298
          %300 = vst [vmem:[#allocation4] sm:$0xff] %v299
          %v301 = vld [vmem:[#allocation5] sm:$0xff]
          %v302 = vadd.f32 %v256, 0.0
          %v303 = vadd.f32 %v301, %v302
          %304 = vst [vmem:[#allocation5] sm:$0xff] %v303
        $region44: #{tpu_custom_call.1} parent=27 // pred_fallthru
          _
        // Predicated region
        $region45: #{tpu_custom_call.1} parent=27 // pred_check
          %p305 = pneg %p261
        $region46: #{tpu_custom_call.1} parent=27 // pred_check_branch
          %307 = sbr.rel (%p305) target = $region48
        $region47: #{tpu_custom_call.1} parent=27 // pred_region
          %v308 = vlaneseq
          %v309 = vshrl.u32 %v308, 7
          %v310 = vlaneseq
          %v311 = vand.u32 %v310, 127
          %v312 = vstv %s258
          %v313 = vadd.s32 %v312, %v309
          %v314 = vmul.u32 %v313, 128
          %v315 = vadd.s32 %v314, %v311
          %vm316 = vcmp.lt.s32.totalorder %v315, 1024
          %v317 = vsel %vm316, %v255, -10000.0
          %v318 = vsel %vm316, %v256, 0.0
          %v319 = vand.u32 2147483647, %v317
          %v320 = vsub.f32 0.0, %v319
          %v321 = vmul.f32 %v320, 1.442695
          %v322 = vpow.pop %v321
          %v323 = vadd.f32 %v322, 1.0
          %v324 = vlog2.pop %v323
          %v325 = vmul.f32 %v324, 0.6931472
          %v326 = vmul.f32 -0.5, %v322
          %v327 = vadd.f32 %v326, 1.0
          %v328 = vmul.f32 %v327, %v322
          %v329 = vand.u32 2147483647, %v322
          %vm330 = vcmp.lt.f32.partialorder %v329, 0.0004427343
          %v331 = vsel %vm330, %v328, %v325
          %v332 = vmax.f32 %v317, 0.0
          %v333 = vmul.f32 %v317, %v318
          %v334 = vsub.f32 %v332, %v333
          %v335 = vadd.f32 %v334, %v331
          %v336 = vadd.f32 %v322, 1.0
          %v337 = vrcp.pop %v336
          %vm338 = vcmp.ge.f32.partialorder %v317, 0.0
          %v339 = vmul.f32 %v322, %v337
          %v340 = vsel %vm338, %v337, %v339
          %v341 = vld [vmem:[#allocation2] sm:$0xff]
          %v342 = vadd.f32 %v335, 0.0
          %v343 = vadd.f32 %v341, %v342
          %344 = vst [vmem:[#allocation2] sm:$0xff] %v343
          %v345 = vld [vmem:[#allocation3] sm:$0xff]
          %v346 = vmul.f32 %v340, %v318
          %v347 = vadd.f32 %v346, 0.0
          %v348 = vadd.f32 %v345, %v347
          %349 = vst [vmem:[#allocation3] sm:$0xff] %v348
          %v350 = vld [vmem:[#allocation4] sm:$0xff]
          %v351 = vadd.f32 %v340, 0.0
          %v352 = vadd.f32 %v350, %v351
          %353 = vst [vmem:[#allocation4] sm:$0xff] %v352
          %v354 = vld [vmem:[#allocation5] sm:$0xff]
          %v355 = vadd.f32 %v318, 0.0
          %v356 = vadd.f32 %v354, %v355
          %357 = vst [vmem:[#allocation5] sm:$0xff] %v356
        $region48: #{tpu_custom_call.1} parent=27 // pred_fallthru
          _
        // Predicated region
        $region49: #{tpu_custom_call.1} parent=27 // pred_check
          %p358 = pneg %p247
        $region50: #{tpu_custom_call.1} parent=27 // pred_check_branch
          %360 = sbr.rel (%p358) target = $region52
        $region51: #{tpu_custom_call.1} parent=27 // pred_region
          %v361 = vld [vmem:[#allocation2] sm:$0xff]
          %362 = vst [vmem:[%s240] sm:$0xff] %v361
          %v363 = vld [vmem:[#allocation3] sm:$0xff]
          %s364 = scalar_lea.vmem %s240, 8 [#allocation11]
          %365 = vst [vmem:[%s364] sm:$0xff] %v363
          %v366 = vld [vmem:[#allocation4] sm:$0xff]
          %s367 = scalar_lea.vmem %s240, 16 [#allocation11]
          %368 = vst [vmem:[%s367] sm:$0xff] %v366
          %v369 = vld [vmem:[#allocation5] sm:$0xff]
          %s370 = scalar_lea.vmem %s240, 24 [#allocation11]
          %371 = vst [vmem:[%s370] sm:$0xff] %v369
        $region52: #{tpu_custom_call.1} parent=27 // pred_fallthru
          _
        %s372 = sand.u32 %s119, 1
        %s373 = scalar_lea.sflag [#allocation8], %s372
        %s374 = sand.u32 %s119, 1
        %s375 = smul.addr %s374, 32
        %s376 = scalar_lea.vmem [#allocation11], %s375
        // Predicated region
        $region53: #{tpu_custom_call.1} parent=27 // pred_check
          %p377 = pneg %p129
        $region54: #{tpu_custom_call.1} parent=27 // pred_check_branch
          %379 = sbr.rel (%p377) target = $region56
        $region55: #{tpu_custom_call.1} parent=27 // pred_region
          %s381 = ssub.s32 512, 512
          %382 = vsyncadd %s373, %s381
          %s383 = smul.addr %s28, 4
          %s384 = smul.addr %s27, 4
          %s385 = sadd.s32 %s383, %s384
          %s386 = smul.addr %s385, 128
          %s387 = scalar_lea.hbm %s2, %s386
          %s388 = sshll.u32 %s376, 4
          %s389 = int_to_ptr.vmem [resolvable:$true] %s388
          %394 = dma.vmem_to_hbm [thread:$0]  %s389, 512, %s387, %s373, 128, 128, 8
        $region56: #{tpu_custom_call.1} parent=27 // pred_fallthru
          _
      $region28: #{tpu_custom_call.1} parent=5 // pred_fallthru
        _
      %p395 = scmp.le.s32.totalorder 2, %s17
      // Predicated region
      $region57: #{tpu_custom_call.1} parent=5 // pred_check
        %p396 = pneg %p395
      $region58: #{tpu_custom_call.1} parent=5 // pred_check_branch
        %398 = sbr.rel (%p396) target = $region60
      $region59: #{tpu_custom_call.1} parent=5 // pred_region
        %s399 = ssub.s32 %s17, 2
        // Predicated region
        $region61: #{tpu_custom_call.1} parent=59 // pred_check
          %p400 = pneg %p135
        $region62: #{tpu_custom_call.1} parent=59 // pred_check_branch
          %402 = sbr.rel (%p400) target = $region64
        $region63: #{tpu_custom_call.1} parent=59 // pred_region
          %s403 = sand.u32 %s120, 1
          %s404 = scalar_lea.sflag [#allocation8], %s403
          %s405 = sand.u32 %s120, 1
          %s406 = smul.addr %s405, 32
          %s407 = scalar_lea.vmem [#allocation11], %s406
          %408 = dma.done %s404, 512
        $region64: #{tpu_custom_call.1} parent=59 // pred_fallthru
          _
      $region60: #{tpu_custom_call.1} parent=5 // pred_fallthru
        _
    $region6: #{tpu_custom_call.1} parent=1 // loop_footer
      %s21 = sadd.s32 1, %s17
    $region7: #{tpu_custom_call.1} parent=1 // loop_footer_branch
      %16 = sbr.rel target = $region3
    $region8: #{tpu_custom_call.1} parent=1 // loop_exit
      _
    %409 = vsyncpa [#allocation7], 1
    %s410 = scalar_lea.sflag [#allocation7], 1
    %411 = vsyncpa %s410, 1
    %412 = vsyncpa [#allocation10], 1
    %s413 = scalar_lea.sflag [#allocation10], 1
    %414 = vsyncpa %s413, 1
    %415 = vsyncpa [#allocation8], 1
    %s416 = scalar_lea.sflag [#allocation8], 1
    %417 = vsyncpa %s416, 1

</llo_original>
